<compile_context>
chip_gen: v7x
topology: tpu7x:2x2x1
jax: 0.10.0
libtpu: 0.0.40
codegen_flags: <defaults>
</compile_context>

<pallas_src>
import functools
import math

import jax
import jax.numpy as jnp
from jax.experimental import pallas as pl
from jax.experimental.pallas import tpu as pltpu


def _mixed_loss_kernel(x_ref, y_ref, focal_ref, inter_ref, denom_ref, *, gamma):
    """Per-tile focal/dice partial sums accumulated into (BP, 1) output blocks."""
    k = pl.program_id(1)

    @pl.when(k == 0)
    def _init():
        focal_ref[...] = jnp.zeros_like(focal_ref)
        inter_ref[...] = jnp.zeros_like(inter_ref)
        denom_ref[...] = jnp.zeros_like(denom_ref)

    x = x_ref[...].astype(jnp.float32)
    y = y_ref[...].astype(jnp.float32)
    is_pos = y > 0.5                       # binary targets assumed

    # 3 transcendentals/element: exp(-|x|), log(1+e), and one divide (vrcp+refine).
    e = jnp.exp(-jnp.abs(x))
    one_plus_e = 1.0 + e
    s = jnp.maximum(-x, 0.0) + jnp.log(one_plus_e)         # softplus(-x), torch-stable form
    sx = jnp.where(x >= 0.0, 1.0, e) / one_plus_e           # sigmoid(x), reused for dice+focal

    # BCE-with-logits (binary y): x - x*y + softplus(-x) == where(y, s, x + s).
    bce = jnp.where(is_pos, s, x + s)

    # Focal modulator exp(gamma*logsigmoid(-x*(2y-1))) == where(y, 1-sx, sx)**gamma.
    p = jnp.where(is_pos, 1.0 - sx, sx)
    g = float(gamma)
    if g.is_integer() and 1.0 <= g <= 8.0:
        mod = p
        for _ in range(int(g) - 1):        # unrolled VPU multiplies, no extra EUP op
            mod = mod * p
    else:
        # General gamma: logsigmoid(-x*(2y-1)) == -(softplus(-x) + x*y) for binary y.
        mod = jnp.exp(-g * jnp.where(is_pos, s + x, s))

    # Per-tile lane reduction straight into the grid-resident (BP, 1) outputs.
    focal_ref[...] += jnp.sum(mod * bce, axis=-1, keepdims=True)
    inter_ref[...] += jnp.sum(sx * y, axis=-1, keepdims=True)
    denom_ref[...] += jnp.sum(sx + y, axis=-1, keepdims=True)


def _cdiv(a, b):
    return -(-a // b)


def _round_up(a, m):
    return _cdiv(a, m) * m


def _choose_tiling(B, D, *, block_bytes, tile_d_cap, num_cores):
    """Pick (r, dp, TILE_D, num_tiles): rows packed (B,D)->(B*r, dp) with dp a
    multiple of TILE_D and B*r a multiple of 16 (or 8) when padding stays small."""
    # 1) Sublane packing: prefer BP % 16 == 0 (full bf16 packing), then % 8.
    r = 1
    for target in (16, 8):
        cand = target // math.gcd(B, target)
        dp_min_c = _round_up(_cdiv(D, cand), 128)
        pad_c = cand * dp_min_c - D
        if cand == 1 or pad_c * 8 <= D:     # accept <=12.5% padding overhead
            r = cand
            break
    dp_min = _round_up(_cdiv(D, r), 128)
    BP = B * r

    # 2) Tile width from a byte budget on the f32 working set (feedback: ~2-4 MiB).
    target_tile = max(128, (block_bytes // (4 * BP)) // 128 * 128)
    if tile_d_cap is not None:
        target_tile = min(target_tile, max(128, (tile_d_cap // 128) * 128))

    num_tiles = _cdiv(dp_min, target_tile)
    num_tiles = _round_up(num_tiles, max(1, num_cores))     # even per-core split
    tile_d = _round_up(_cdiv(dp_min, num_tiles), 128)
    dp = num_tiles * tile_d
    return r, dp, tile_d, num_tiles


# Pad value for x: exp(-|PAD|) underflows to 0, so bce = x + s == 0 exactly,
# sigmoid == 0, modulator == 0 -> padded elements contribute exactly zero to
# every partial sum (y is padded with 0).
_PAD_X = -1.0e4


def mixed_loss(x, y, *, alpha, gamma, block_bytes=2 << 20, tile_d=None,
               num_cores=1, input_buffers=None):
    """x, y: NCHW arrays of identical shape; y must be a binary {0,1} mask.

    bf16/f16 inputs are supported and recommended on v5e/v6e (they stay narrow in
    HBM and are upcast in-kernel).  On v7x pass num_cores=2 to shard the feature
    tiles across both TensorCores (pltpu.CORE_PARALLEL).  Returns scalar f32 loss.
    """
    assert x.shape == y.shape
    B = x.shape[0]
    D = math.prod(x.shape[1:])
    num_cores = max(1, int(num_cores))

    r, dp, TILE_D, num_tiles = _choose_tiling(
        B, D, block_bytes=block_bytes, tile_d_cap=tile_d, num_cores=num_cores)
    BP = B * r
    pad = r * dp - D

    xf = x.reshape(B, D)
    yf = y.reshape(B, D)
    if pad:
        xf = jnp.pad(xf, ((0, 0), (0, pad)), constant_values=_PAD_X)
        yf = jnp.pad(yf, ((0, 0), (0, pad)))        # zeros
    x2 = xf.reshape(BP, dp)
    y2 = yf.reshape(BP, dp)

    ncores = num_cores if (num_cores > 1 and num_tiles % num_cores == 0) else 1
    tiles_per_core = num_tiles // ncores

    def in_map(c, k):
        return (0, c * tiles_per_core + k)

    spec_kwargs = {}
    if input_buffers is not None:
        spec_kwargs["pipeline_mode"] = pl.Buffered(int(input_buffers))
    in_specs = [pl.BlockSpec((BP, TILE_D), in_map, **spec_kwargs),
                pl.BlockSpec((BP, TILE_D), in_map, **spec_kwargs)]

    row_out_spec = pl.BlockSpec((None, BP, 1), lambda c, k: (c, 0, 0))
    row_out_shape = jax.ShapeDtypeStruct((ncores, BP, 1), jnp.float32)

    if ncores > 1:
        dim_sems = (pltpu.CORE_PARALLEL, pltpu.ARBITRARY)   # v7x: use both TCs
    else:
        dim_sems = ("arbitrary", "arbitrary")

    # Double-buffered inputs + a handful of f32 elementwise temporaries; cap at
    # 32 MiB so v7x (64 MiB physical VMEM) keeps compiler-scratch headroom.
    in_block_bytes = BP * TILE_D * (x2.dtype.itemsize + y2.dtype.itemsize)
    vmem_need = 2 * in_block_bytes + 8 * BP * TILE_D * 4 + (1 << 20)
    vmem_limit = int(min(max(vmem_need, 16 << 20), 32 << 20))

    kernel = functools.partial(_mixed_loss_kernel, gamma=float(gamma))

    focal_rows, inter_rows, denom_rows = pl.pallas_call(
        kernel,
        out_shape=(row_out_shape, row_out_shape, row_out_shape),
        grid=(ncores, tiles_per_core),
        in_specs=in_specs,
        out_specs=(row_out_spec, row_out_spec, row_out_spec),
        compiler_params=pltpu.CompilerParams(
            dimension_semantics=dim_sems,
            vmem_limit_bytes=vmem_limit,
        ),
    )(x2, y2)

    # Tiny O(B) epilogue in plain JAX: combine per-core partials, fold packed rows
    # back to the original batch rows, then dice + focal + mix.
    focal = jnp.sum(focal_rows) / float(B * D)
    inter_b = jnp.sum(inter_rows, axis=(0, 2)).reshape(B, r).sum(axis=1)
    denom_b = jnp.sum(denom_rows, axis=(0, 2)).reshape(B, r).sum(axis=1)
    smooth = 1.0
    dice = jnp.sum(2.0 * (inter_b + smooth) / (denom_b + smooth)) / B
    return alpha * focal - jnp.log(dice)


def _reference(x, y, alpha, gamma):
    # Pure-JAX reference mirroring the PyTorch module.
    B = x.shape[0]
    xf = x.reshape(B, -1).astype(jnp.float32)
    yf = y.reshape(B, -1).astype(jnp.float32)
    max_val = jnp.maximum(-xf, 0.0)
    loss = xf - xf * yf + max_val + jnp.log(jnp.exp(-max_val) + jnp.exp(-xf - max_val))
    invprobs = jax.nn.log_sigmoid(-xf * (yf * 2.0 - 1.0))
    focal = jnp.mean(jnp.exp(invprobs * gamma) * loss)
    sx = jax.nn.sigmoid(xf)
    inter = jnp.sum(sx * yf, axis=1)
    dice = jnp.sum(2.0 * (inter + 1.0) / (jnp.sum(sx, axis=1) + jnp.sum(yf, axis=1) + 1.0)) / B
    return alpha * focal - jnp.log(dice)


if __name__ == "__main__":
    key = jax.random.PRNGKey(0)
    kx, ky = jax.random.split(key)
    alpha, gamma = 10.0, 2.0           # typical MixedLoss hyperparameters

    # 1) Primary small config (NCHW -> flattened D = 4*16*16 = 1024), f32, one tile.
    B, C, H, W = 2, 4, 16, 16
    x = jax.random.normal(kx, (B, C, H, W), dtype=jnp.float32)            # logits
    y = (jax.random.uniform(ky, (B, C, H, W)) > 0.5).astype(jnp.float32)  # binary mask
    out = jax.block_until_ready(mixed_loss(x, y, alpha=alpha, gamma=gamma))
    ref = _reference(x, y, alpha, gamma)
    assert jnp.allclose(out, ref, rtol=1e-4, atol=1e-5), (out, ref)

    # 2) Multiple feature tiles per core (tile_d cap) -> exercises accumulate path.
    B2, C2, H2, W2 = 2, 3, 32, 32
    x2 = jax.random.normal(kx, (B2, C2, H2, W2), dtype=jnp.float32)
    y2 = (jax.random.uniform(ky, (B2, C2, H2, W2)) > 0.5).astype(jnp.float32)
    out2 = jax.block_until_ready(mixed_loss(x2, y2, alpha=alpha, gamma=gamma, tile_d=128))
    ref2 = _reference(x2, y2, alpha, gamma)
    assert jnp.allclose(out2, ref2, rtol=1e-4, atol=1e-5), (out2, ref2)

    # 3) bf16 caller-side inputs (exact for the binary mask; logits quantize to bf16):
    #    kernel upcasts in-kernel, halving HBM traffic.  Reference uses same values.
    xb = x2.astype(jnp.bfloat16)
    yb = y2.astype(jnp.bfloat16)
    out3 = jax.block_until_ready(mixed_loss(xb, yb, alpha=alpha, gamma=gamma, tile_d=128))
    ref3 = _reference(xb.astype(jnp.float32), yb.astype(jnp.float32), alpha, gamma)
    assert jnp.allclose(out3, ref3, rtol=1e-4, atol=1e-5), (out3, ref3)

    # 4) Non-128-multiple D (3*10*10 = 300) -> exercises the zero-contribution padding path.
    B4, C4, H4, W4 = 2, 3, 10, 10
    x4 = jax.random.normal(kx, (B4, C4, H4, W4), dtype=jnp.float32)
    y4 = (jax.random.uniform(ky, (B4, C4, H4, W4)) > 0.5).astype(jnp.float32)
    out4 = jax.block_until_ready(mixed_loss(x4, y4, alpha=alpha, gamma=gamma, tile_d=128))
    ref4 = _reference(x4, y4, alpha, gamma)
    assert jnp.allclose(out4, ref4, rtol=1e-4, atol=1e-5), (out4, ref4)

    print("KERNEL_OK")
</pallas_src>

<mosaic_0001>
module attributes {stable_mosaic.version = 11 : i64} {
  func.func @_mixed_loss_kernel(%arg0: i32, %arg1: i32, %arg2: memref<16x128xf32, #tpu.memory_space<vmem>>, %arg3: memref<16x128xf32, #tpu.memory_space<vmem>>, %arg4: memref<1x16x1xf32, #tpu.memory_space<vmem>>, %arg5: memref<1x16x1xf32, #tpu.memory_space<vmem>>, %arg6: memref<1x16x1xf32, #tpu.memory_space<vmem>>) attributes {dimension_semantics = [#tpu.dimension_semantics<arbitrary>, #tpu.dimension_semantics<arbitrary>], iteration_bounds = array<i64: 1, 1>, scalar_prefetch = 0 : i64, scratch_operands = 0 : i64, tpu.core_type = #tpu.core_type<tc>, window_params = [{transform_indices = @transform_0, window_bounds = array<i64: 16, 128>}, {transform_indices = @transform_1, window_bounds = array<i64: 16, 128>}, {transform_indices = @transform_2, window_bounds = array<i64: 1, 16, 1>}, {transform_indices = @transform_3, window_bounds = array<i64: 1, 16, 1>}, {transform_indices = @transform_4, window_bounds = array<i64: 1, 16, 1>}]} {
    %c0_i32 = arith.constant 0 : i32
    %0 = arith.cmpi eq, %arg1, %c0_i32 : i32
    %1 = arith.extui %0 : i1 to i32
    %c0_i32_0 = arith.constant 0 : i32
    %2 = arith.cmpi ne, %1, %c0_i32_0 : i32
    scf.if %2 {
      %cst_32 = arith.constant 0.000000e+00 : f32
      %57 = vector.broadcast %cst_32 : f32 to vector<16x1xf32>
      %c0_33 = arith.constant 0 : index
      %c0_34 = arith.constant 0 : index
      %c0_35 = arith.constant 0 : index
      %58 = vector.load %arg4[%c0_33, %c0_34, %c0_35] : memref<1x16x1xf32, #tpu.memory_space<vmem>>, vector<1x16x1xf32>
      %59 = vector.shape_cast %58 : vector<1x16x1xf32> to vector<16x1xf32>
      %60 = vector.shape_cast %57 : vector<16x1xf32> to vector<1x16x1xf32>
      tpu.vector_store %arg4[%c0_33, %c0_34, %c0_35], %60 {strides = array<i32>} : memref<1x16x1xf32, #tpu.memory_space<vmem>>, vector<1x16x1xf32>,
      %cst_36 = arith.constant 0.000000e+00 : f32
      %61 = vector.broadcast %cst_36 : f32 to vector<16x1xf32>
      %c0_37 = arith.constant 0 : index
      %c0_38 = arith.constant 0 : index
      %c0_39 = arith.constant 0 : index
      %62 = vector.load %arg5[%c0_37, %c0_38, %c0_39] : memref<1x16x1xf32, #tpu.memory_space<vmem>>, vector<1x16x1xf32>
      %63 = vector.shape_cast %62 : vector<1x16x1xf32> to vector<16x1xf32>
      %64 = vector.shape_cast %61 : vector<16x1xf32> to vector<1x16x1xf32>
      tpu.vector_store %arg5[%c0_37, %c0_38, %c0_39], %64 {strides = array<i32>} : memref<1x16x1xf32, #tpu.memory_space<vmem>>, vector<1x16x1xf32>,
      %cst_40 = arith.constant 0.000000e+00 : f32
      %65 = vector.broadcast %cst_40 : f32 to vector<16x1xf32>
      %c0_41 = arith.constant 0 : index
      %c0_42 = arith.constant 0 : index
      %c0_43 = arith.constant 0 : index
      %66 = vector.load %arg6[%c0_41, %c0_42, %c0_43] : memref<1x16x1xf32, #tpu.memory_space<vmem>>, vector<1x16x1xf32>
      %67 = vector.shape_cast %66 : vector<1x16x1xf32> to vector<16x1xf32>
      %68 = vector.shape_cast %65 : vector<16x1xf32> to vector<1x16x1xf32>
      tpu.vector_store %arg6[%c0_41, %c0_42, %c0_43], %68 {strides = array<i32>} : memref<1x16x1xf32, #tpu.memory_space<vmem>>, vector<1x16x1xf32>,
    } else {
    }
    %c0 = arith.constant 0 : index
    %c0_1 = arith.constant 0 : index
    %3 = vector.load %arg2[%c0, %c0_1] : memref<16x128xf32, #tpu.memory_space<vmem>>, vector<16x128xf32>
    %c0_2 = arith.constant 0 : index
    %c0_3 = arith.constant 0 : index
    %4 = vector.load %arg3[%c0_2, %c0_3] : memref<16x128xf32, #tpu.memory_space<vmem>>, vector<16x128xf32>
    %cst = arith.constant 5.000000e-01 : f32
    %5 = vector.broadcast %cst : f32 to vector<16x128xf32>
    %6 = arith.cmpf ogt, %4, %5 : vector<16x128xf32>
    %7 = math.absf %3 : vector<16x128xf32>
    %cst_4 = arith.constant 0.000000e+00 : f32
    %8 = vector.broadcast %cst_4 : f32 to vector<16x128xf32>
    %9 = arith.subf %8, %7 : vector<16x128xf32>
    %10 = math.exp %9 : vector<16x128xf32>
    %cst_5 = arith.constant 1.000000e+00 : f32
    %11 = vector.broadcast %cst_5 : f32 to vector<16x128xf32>
    %12 = arith.addf %11, %10 : vector<16x128xf32>
    %cst_6 = arith.constant 0.000000e+00 : f32
    %13 = vector.broadcast %cst_6 : f32 to vector<16x128xf32>
    %14 = arith.subf %13, %3 : vector<16x128xf32>
    %cst_7 = arith.constant 0.000000e+00 : f32
    %15 = vector.broadcast %cst_7 : f32 to vector<16x128xf32>
    %16 = arith.maximumf %14, %15 : vector<16x128xf32>
    %17 = math.log %12 : vector<16x128xf32>
    %18 = arith.addf %16, %17 : vector<16x128xf32>
    %cst_8 = arith.constant 0.000000e+00 : f32
    %19 = vector.broadcast %cst_8 : f32 to vector<16x128xf32>
    %20 = arith.cmpf oge, %3, %19 : vector<16x128xf32>
    %cst_9 = arith.constant 1.000000e+00 : f32
    %21 = vector.broadcast %cst_9 : f32 to vector<16x128xf32>
    %22 = arith.select %20, %21, %10 : vector<16x128xi1>, vector<16x128xf32>
    %23 = arith.divf %22, %12 : vector<16x128xf32>
    %24 = arith.addf %3, %18 : vector<16x128xf32>
    %25 = arith.select %6, %18, %24 : vector<16x128xi1>, vector<16x128xf32>
    %cst_10 = arith.constant 1.000000e+00 : f32
    %26 = vector.broadcast %cst_10 : f32 to vector<16x128xf32>
    %27 = arith.subf %26, %23 : vector<16x128xf32>
    %28 = arith.select %6, %27, %23 : vector<16x128xi1>, vector<16x128xf32>
    %29 = arith.mulf %28, %28 : vector<16x128xf32>
    %c0_11 = arith.constant 0 : index
    %c0_12 = arith.constant 0 : index
    %c0_13 = arith.constant 0 : index
    %30 = vector.load %arg4[%c0_11, %c0_12, %c0_13] : memref<1x16x1xf32, #tpu.memory_space<vmem>>, vector<1x16x1xf32>
    %31 = vector.shape_cast %30 : vector<1x16x1xf32> to vector<16x1xf32>
    %32 = arith.mulf %29, %25 : vector<16x128xf32>
    %cst_14 = arith.constant dense<0.000000e+00> : vector<16xf32>
    %33 = vector.multi_reduction <add>, %32, %cst_14 [1] : vector<16x128xf32> to vector<16xf32>
    %34 = vector.shape_cast %33 : vector<16xf32> to vector<16x1xf32>
    %35 = arith.addf %31, %34 : vector<16x1xf32>
    %c0_15 = arith.constant 0 : index
    %c0_16 = arith.constant 0 : index
    %c0_17 = arith.constant 0 : index
    %36 = vector.load %arg4[%c0_15, %c0_16, %c0_17] : memref<1x16x1xf32, #tpu.memory_space<vmem>>, vector<1x16x1xf32>
    %37 = vector.shape_cast %36 : vector<1x16x1xf32> to vector<16x1xf32>
    %38 = vector.shape_cast %35 : vector<16x1xf32> to vector<1x16x1xf32>
    tpu.vector_store %arg4[%c0_15, %c0_16, %c0_17], %38 {strides = array<i32>} : memref<1x16x1xf32, #tpu.memory_space<vmem>>, vector<1x16x1xf32>,
    %c0_18 = arith.constant 0 : index
    %c0_19 = arith.constant 0 : index
    %c0_20 = arith.constant 0 : index
    %39 = vector.load %arg5[%c0_18, %c0_19, %c0_20] : memref<1x16x1xf32, #tpu.memory_space<vmem>>, vector<1x16x1xf32>
    %40 = vector.shape_cast %39 : vector<1x16x1xf32> to vector<16x1xf32>
    %41 = arith.mulf %23, %4 : vector<16x128xf32>
    %cst_21 = arith.constant dense<0.000000e+00> : vector<16xf32>
    %42 = vector.multi_reduction <add>, %41, %cst_21 [1] : vector<16x128xf32> to vector<16xf32>
    %43 = vector.shape_cast %42 : vector<16xf32> to vector<16x1xf32>
    %44 = arith.addf %40, %43 : vector<16x1xf32>
    %c0_22 = arith.constant 0 : index
    %c0_23 = arith.constant 0 : index
    %c0_24 = arith.constant 0 : index
    %45 = vector.load %arg5[%c0_22, %c0_23, %c0_24] : memref<1x16x1xf32, #tpu.memory_space<vmem>>, vector<1x16x1xf32>
    %46 = vector.shape_cast %45 : vector<1x16x1xf32> to vector<16x1xf32>
    %47 = vector.shape_cast %44 : vector<16x1xf32> to vector<1x16x1xf32>
    tpu.vector_store %arg5[%c0_22, %c0_23, %c0_24], %47 {strides = array<i32>} : memref<1x16x1xf32, #tpu.memory_space<vmem>>, vector<1x16x1xf32>,
    %c0_25 = arith.constant 0 : index
    %c0_26 = arith.constant 0 : index
    %c0_27 = arith.constant 0 : index
    %48 = vector.load %arg6[%c0_25, %c0_26, %c0_27] : memref<1x16x1xf32, #tpu.memory_space<vmem>>, vector<1x16x1xf32>
    %49 = vector.shape_cast %48 : vector<1x16x1xf32> to vector<16x1xf32>
    %50 = arith.addf %23, %4 : vector<16x128xf32>
    %cst_28 = arith.constant dense<0.000000e+00> : vector<16xf32>
    %51 = vector.multi_reduction <add>, %50, %cst_28 [1] : vector<16x128xf32> to vector<16xf32>
    %52 = vector.shape_cast %51 : vector<16xf32> to vector<16x1xf32>
    %53 = arith.addf %49, %52 : vector<16x1xf32>
    %c0_29 = arith.constant 0 : index
    %c0_30 = arith.constant 0 : index
    %c0_31 = arith.constant 0 : index
    %54 = vector.load %arg6[%c0_29, %c0_30, %c0_31] : memref<1x16x1xf32, #tpu.memory_space<vmem>>, vector<1x16x1xf32>
    %55 = vector.shape_cast %54 : vector<1x16x1xf32> to vector<16x1xf32>
    %56 = vector.shape_cast %53 : vector<16x1xf32> to vector<1x16x1xf32>
    tpu.vector_store %arg6[%c0_29, %c0_30, %c0_31], %56 {strides = array<i32>} : memref<1x16x1xf32, #tpu.memory_space<vmem>>, vector<1x16x1xf32>,
    return
  }
  func.func @transform_0(%arg0: i32, %arg1: i32) -> (i32, i32) {
    %c1_i32 = arith.constant 1 : i32
    %0 = arith.muli %arg0, %c1_i32 : i32
    %1 = arith.addi %0, %arg1 : i32
    %c0_i32 = arith.constant 0 : i32
    %c0_i32_0 = arith.constant 0 : i32
    return %c0_i32, %1 : i32, i32
  }
  func.func @transform_1(%arg0: i32, %arg1: i32) -> (i32, i32) {
    %c1_i32 = arith.constant 1 : i32
    %0 = arith.muli %arg0, %c1_i32 : i32
    %1 = arith.addi %0, %arg1 : i32
    %c0_i32 = arith.constant 0 : i32
    %c0_i32_0 = arith.constant 0 : i32
    return %c0_i32, %1 : i32, i32
  }
  func.func @transform_2(%arg0: i32, %arg1: i32) -> (i32, i32, i32) {
    %c0_i32 = arith.constant 0 : i32
    %c0_i32_0 = arith.constant 0 : i32
    %c0_i32_1 = arith.constant 0 : i32
    return %arg0, %c0_i32, %c0_i32_0 : i32, i32, i32
  }
  func.func @transform_3(%arg0: i32, %arg1: i32) -> (i32, i32, i32) {
    %c0_i32 = arith.constant 0 : i32
    %c0_i32_0 = arith.constant 0 : i32
    %c0_i32_1 = arith.constant 0 : i32
    return %arg0, %c0_i32, %c0_i32_0 : i32, i32, i32
  }
  func.func @transform_4(%arg0: i32, %arg1: i32) -> (i32, i32, i32) {
    %c0_i32 = arith.constant 0 : i32
    %c0_i32_0 = arith.constant 0 : i32
    %c0_i32_1 = arith.constant 0 : i32
    return %arg0, %c0_i32, %c0_i32_0 : i32, i32, i32
  }
}

</mosaic_0001>

<llo_original>
// kernel: tpu_custom_call.1
$region0: #{tpu_custom_call.1}
  #allocation0 [shape = 'u32[]', space=smem, size = 0x4, offset = 0x4, fixed_abs, tag = 'smem constant byte address 0x4 - core index']
  #allocation1 [shape = 'u32[144,128]{1,0:T(1,128)}', space=vmem, size = 0x12000, scoped, tag = 'internal scratch']
  %s0 = inlined_call_operand.hbm [shape: f32[16,128], index: 0, kind: input, shape index: {}]
  %s1 = inlined_call_operand.hbm [shape: f32[16,128], index: 1, kind: input, shape index: {}]
  %s2 = inlined_call_operand.vmem [shape: f32[1,16,1], index: 2, kind: output, shape index: {0}]
  %s3 = inlined_call_operand.vmem [shape: f32[1,16,1], index: 3, kind: output, shape index: {1}]
  %s4 = inlined_call_operand.vmem [shape: f32[1,16,1], index: 4, kind: output, shape index: {2}]
  %5 = xla_tuple %s2, %s3, %s4
  %s6 = sld [smem:[#allocation0]]
  $region46: #{tpu_custom_call.1} parent=0
    _
  %s8 = ssub.s32 1, %s6
  %s9 = scalar_select 0, %s8, %s6
  $region1: #{tpu_custom_call.1} parent=0
    #allocation2 [shape = 'u8[8192]{0}', space=vmem, size = 0x2000, scoped, tag = 'input window, operand 0, single buffered']
    #allocation3 [shape = 's32[1]{0}', space=sflag, size = 0x4, scoped, tag = 'scoped memory for tpu_custom_call.1']
    #allocation4 [shape = 'u8[8192]{0}', space=vmem, size = 0x2000, scoped, tag = 'input window, operand 1, single buffered']
    #allocation5 [shape = 's32[1]{0}', space=sflag, size = 0x4, scoped, tag = 'scoped memory for tpu_custom_call.1']
    %10 = vsyncpa [#allocation3], 0
    %11 = vsyncpa [#allocation5], 0
    // Predicated region
    $region2: #{tpu_custom_call.1} parent=1 // pred_check
      _
    $region3: #{tpu_custom_call.1} parent=1 // pred_check_branch
      %13 = sbr.rel (0) target = $region5
    $region4: #{tpu_custom_call.1} parent=1 // pred_region
      %s14 = sadd.s32 0, 0
      %s16 = ssub.s32 256, 256
      %17 = vsyncadd [#allocation3], %s16
      %s18 = smul.addr %s14, 128
      %s19 = scalar_lea.hbm %s0, %s18
      %s20 = sshll.u32 [#allocation2], 4
      %s21 = int_to_ptr.vmem [resolvable:$true] %s20
      %26 = dma.hbm_to_vmem [thread:$0]  %s19, 256, %s21, [#allocation3], 128, 128, 8
    $region5: #{tpu_custom_call.1} parent=1 // pred_fallthru
      _
    // Predicated region
    $region6: #{tpu_custom_call.1} parent=1 // pred_check
      _
    $region7: #{tpu_custom_call.1} parent=1 // pred_check_branch
      %28 = sbr.rel (0) target = $region9
    $region8: #{tpu_custom_call.1} parent=1 // pred_region
      %s29 = sadd.s32 0, 0
      %s31 = ssub.s32 256, 256
      %32 = vsyncadd [#allocation5], %s31
      %s33 = smul.addr %s29, 128
      %s34 = scalar_lea.hbm %s1, %s33
      %s35 = sshll.u32 [#allocation4], 4
      %s36 = int_to_ptr.vmem [resolvable:$true] %s35
      %41 = dma.hbm_to_vmem [thread:$0]  %s34, 256, %s36, [#allocation5], 128, 128, 8
    $region9: #{tpu_custom_call.1} parent=1 // pred_fallthru
      _
    // Predicated region
    $region10: #{tpu_custom_call.1} parent=1 // pred_check
      _
    $region11: #{tpu_custom_call.1} parent=1 // pred_check_branch
      %43 = sbr.rel (0) target = $region13
    $region12: #{tpu_custom_call.1} parent=1 // pred_region
      %44 = dma.done [#allocation3], 256
    $region13: #{tpu_custom_call.1} parent=1 // pred_fallthru
      _
    // Predicated region
    $region14: #{tpu_custom_call.1} parent=1 // pred_check
      _
    $region15: #{tpu_custom_call.1} parent=1 // pred_check_branch
      %46 = sbr.rel (0) target = $region17
    $region16: #{tpu_custom_call.1} parent=1 // pred_region
      %47 = dma.done [#allocation5], 256
    $region17: #{tpu_custom_call.1} parent=1 // pred_fallthru
      _
    %s48 = sadd.s32 0, 0
    %s49 = sadd.s32 0, 0
    %p50 = scmp.eq.s32.totalorder 0, 0
    // Predicated region
    $region18: #{tpu_custom_call.1} parent=1 // pred_check
      %p51 = pneg %p50
    $region19: #{tpu_custom_call.1} parent=1 // pred_check_branch
      %53 = sbr.rel (%p51) target = $region21
    $region20: #{tpu_custom_call.1} parent=1 // pred_region
      %vm54 = vcmask 7168
      %55 = vst.msk [vmem:[%s2] sm:$0xff] %vm54, 0.0
      %56 = vst.msk [vmem:[%s2 + $0x8] sm:$0xff] %vm54, 0.0
      %57 = vst.msk [vmem:[%s3] sm:$0xff] %vm54, 0.0
      %58 = vst.msk [vmem:[%s3 + $0x8] sm:$0xff] %vm54, 0.0
      %59 = vst.msk [vmem:[%s4] sm:$0xff] %vm54, 0.0
      %60 = vst.msk [vmem:[%s4 + $0x8] sm:$0xff] %vm54, 0.0
    $region21: #{tpu_custom_call.1} parent=1 // pred_fallthru
      _
    %v61 = vld [vmem:[#allocation2] sm:$0xff]
    %v62 = vld [vmem:[#allocation2 + $0x8] sm:$0xff]
    %v63 = vld [vmem:[#allocation4] sm:$0xff]
    %v64 = vld [vmem:[#allocation4 + $0x8] sm:$0xff]
    %vm65 = vcmp.gt.f32.partialorder %v63, 0.5
    %vm66 = vcmp.gt.f32.partialorder %v64, 0.5
    %v67 = vand.u32 2147483647, %v61
    %v68 = vand.u32 2147483647, %v62
    %v69 = vsub.f32 0.0, %v67
    %v70 = vsub.f32 0.0, %v68
    %v71 = vmul.f32 %v69, 1.442695
    %v72 = vpow.pop %v71
    %v73 = vmul.f32 %v70, 1.442695
    %v74 = vpow.pop %v73
    %v75 = vadd.f32 %v72, 1.0
    %v76 = vadd.f32 %v74, 1.0
    %v77 = vsub.f32 0.0, %v61
    %v78 = vsub.f32 0.0, %v62
    %v79 = vmax.f32 %v77, 0.0
    %v80 = vmax.f32 %v78, 0.0
    %v81 = vlog2.pop %v75
    %v82 = vmul.f32 %v81, 0.6931472
    %v83 = vlog2.pop %v76
    %v84 = vmul.f32 %v83, 0.6931472
    %v85 = vadd.f32 %v79, %v82
    %v86 = vadd.f32 %v80, %v84
    %vm87 = vcmp.ge.f32.partialorder %v61, 0.0
    %vm88 = vcmp.ge.f32.partialorder %v62, 0.0
    %v89 = vsel %vm87, 1.0, %v72
    %v90 = vsel %vm88, 1.0, %v74
    %v91 = vrcp.pop %v75
    %v92 = vmul.f32 %v89, %v91
    %v93 = vrcp.pop %v76
    %v94 = vmul.f32 %v90, %v93
    %v95 = vadd.f32 %v61, %v85
    %v96 = vadd.f32 %v62, %v86
    %v97 = vsel %vm65, %v85, %v95
    %v98 = vsel %vm66, %v86, %v96
    %v99 = vsub.f32 1.0, %v92
    %v100 = vsub.f32 1.0, %v94
    %v101 = vsel %vm65, %v99, %v92
    %v102 = vsel %vm66, %v100, %v94
    %v103 = vmul.f32 %v101, %v101
    %v104 = vmul.f32 %v102, %v102
    %v105 = vld [vmem:[%s2] sm:$0xff]
    %v106 = vld [vmem:[%s2 + $0x8] sm:$0xff]
    %v107 = vmul.f32 %v103, %v97
    %v108 = vmul.f32 %v104, %v98
    %109 = vadd.xlane.f32.xlu0 %v107
    %v110 = vpop.xlane.xlu0 %109
    %111 = vadd.xlane.f32.xlu0 %v108
    %v112 = vpop.xlane.xlu0 %111
    %v113 = vadd.f32 %v105, %v110
    %v114 = vadd.f32 %v106, %v112
    %vm115 = vcmask 7168
    %116 = vst.msk [vmem:[%s2] sm:$0xff] %vm115, %v113
    %117 = vst.msk [vmem:[%s2 + $0x8] sm:$0xff] %vm115, %v114
    %v118 = vld [vmem:[%s3] sm:$0xff]
    %v119 = vld [vmem:[%s3 + $0x8] sm:$0xff]
    %v120 = vmul.f32 %v92, %v63
    %v121 = vmul.f32 %v94, %v64
    %122 = vadd.xlane.f32.xlu0 %v120
    %v123 = vpop.xlane.xlu0 %122
    %124 = vadd.xlane.f32.xlu0 %v121
    %v125 = vpop.xlane.xlu0 %124
    %v126 = vadd.f32 %v118, %v123
    %v127 = vadd.f32 %v119, %v125
    %128 = vst.msk [vmem:[%s3] sm:$0xff] %vm115, %v126
    %129 = vst.msk [vmem:[%s3 + $0x8] sm:$0xff] %vm115, %v127
    %v130 = vld [vmem:[%s4] sm:$0xff]
    %v131 = vld [vmem:[%s4 + $0x8] sm:$0xff]
    %v132 = vadd.f32 %v92, %v63
    %v133 = vadd.f32 %v94, %v64
    %134 = vadd.xlane.f32.xlu0 %v132
    %v135 = vpop.xlane.xlu0 %134
    %136 = vadd.xlane.f32.xlu0 %v133
    %v137 = vpop.xlane.xlu0 %136
    %v138 = vadd.f32 %v130, %v135
    %v139 = vadd.f32 %v131, %v137
    %140 = vst.msk [vmem:[%s4] sm:$0xff] %vm115, %v138
    %141 = vst.msk [vmem:[%s4 + $0x8] sm:$0xff] %vm115, %v139
    // Predicated region
    $region22: #{tpu_custom_call.1} parent=1 // pred_check
      _
    $region23: #{tpu_custom_call.1} parent=1 // pred_check_branch
      %143 = sbr.rel (0) target = $region25
    $region24: #{tpu_custom_call.1} parent=1 // pred_region
      _
    $region25: #{tpu_custom_call.1} parent=1 // pred_fallthru
      _
    // Predicated region
    $region26: #{tpu_custom_call.1} parent=1 // pred_check
      _
    $region27: #{tpu_custom_call.1} parent=1 // pred_check_branch
      %145 = sbr.rel (0) target = $region29
    $region28: #{tpu_custom_call.1} parent=1 // pred_region
      _
    $region29: #{tpu_custom_call.1} parent=1 // pred_fallthru
      _
    // Predicated region
    $region30: #{tpu_custom_call.1} parent=1 // pred_check
      _
    $region31: #{tpu_custom_call.1} parent=1 // pred_check_branch
      %147 = sbr.rel (0) target = $region33
    $region32: #{tpu_custom_call.1} parent=1 // pred_region
      _
    $region33: #{tpu_custom_call.1} parent=1 // pred_fallthru
      _
    // Predicated region
    $region34: #{tpu_custom_call.1} parent=1 // pred_check
      _
    $region35: #{tpu_custom_call.1} parent=1 // pred_check_branch
      %149 = sbr.rel (0) target = $region37
    $region36: #{tpu_custom_call.1} parent=1 // pred_region
      _
    $region37: #{tpu_custom_call.1} parent=1 // pred_fallthru
      _
    // Predicated region
    $region38: #{tpu_custom_call.1} parent=1 // pred_check
      _
    $region39: #{tpu_custom_call.1} parent=1 // pred_check_branch
      %151 = sbr.rel (0) target = $region41
    $region40: #{tpu_custom_call.1} parent=1 // pred_region
      _
    $region41: #{tpu_custom_call.1} parent=1 // pred_fallthru
      _
    // Predicated region
    $region42: #{tpu_custom_call.1} parent=1 // pred_check
      _
    $region43: #{tpu_custom_call.1} parent=1 // pred_check_branch
      %153 = sbr.rel (0) target = $region45
    $region44: #{tpu_custom_call.1} parent=1 // pred_region
      _
    $region45: #{tpu_custom_call.1} parent=1 // pred_fallthru
      _
    %154 = vsyncpa [#allocation3], 1
    %155 = vsyncpa [#allocation5], 1

</llo_original>
